<compile_context>
chip_gen: v6e
topology: v6e:2x2x1
jax: 0.10.0
libtpu: 0.0.40
codegen_flags: <defaults>
</compile_context>

<pallas_src>
import jax
import jax.numpy as jnp
from jax import lax
from jax.experimental import pallas as pl
from jax.experimental.pallas import tpu as pltpu

K = 5        # conv kernel size
POOL = 18    # maxpool kernel size
STRIDE = 2   # maxpool stride


def _sliding_max(a, axis, window):
    """m[i] = max(a[i : i + window]) along `axis` via a doubling tree (~log2(window) maxima)."""
    m = a
    cur = 1
    while cur < window:
        step = min(cur, window - cur)
        lo = lax.slice_in_dim(m, 0, m.shape[axis] - step, axis=axis)
        hi = lax.slice_in_dim(m, step, m.shape[axis], axis=axis)
        m = jnp.maximum(lo, hi)
        cur += step
    return m


def mynet_kernel(x_ref, wconv_ref, bconv_ref, wlin_ref, blin_ref, o_ref, pad_ref):
    # x_ref   : (H, W)      f32 VMEM  (one image, channel squeezed, unpadded)
    # wconv   : (25,)       f32 SMEM  (flattened 5x5 conv weight)
    # bconv   : (1,)        f32 SMEM
    # wlin    : (1,)        f32 SMEM
    # blin    : (1,)        f32 SMEM
    # o_ref   : (Po_h, Po_w) f32 VMEM (one image's pooled+linear output)
    # pad_ref : (H+2, W+2)  f32 VMEM scratch (zero-padded image)
    H, W = x_ref.shape
    Hp, Wp = pad_ref.shape
    Hc = Hp - K + 1
    Wc = Wp - K + 1
    Po_h = (Hc - POOL) // STRIDE + 1
    Po_w = (Wc - POOL) // STRIDE + 1

    # --- in-kernel zero padding (conv padding=1) ---
    # Re-zero every step so the kernel is independent of grid order (safe with
    # "parallel" batch sharding); the buffer is tiny so this is negligible.
    pad_ref[...] = jnp.zeros_like(pad_ref)
    pad_ref[1:H + 1, 1:W + 1] = x_ref[...]

    # --- conv2d(1, 1, k=5): 25 taps, each a shifted Ref slice (single offset load) ---
    acc = jnp.full((Hc, Wc), bconv_ref[0], dtype=jnp.float32)
    for kh in range(K):
        for kw in range(K):
            acc = acc + pad_ref[kh:kh + Hc, kw:kw + Wc] * wconv_ref[kh * K + kw]

    # --- maxpool(18, stride=2), vectorized ---
    # sliding max along H (log tree), then pick the stride-2 rows
    hm = _sliding_max(acc, axis=0, window=POOL)                    # (Hc-POOL+1, Wc)
    hrows = [hm[pi * STRIDE:pi * STRIDE + 1, :] for pi in range(Po_h)]
    hm2 = jnp.concatenate(hrows, axis=0)                           # (Po_h, Wc)

    # sliding max along W (log tree), then pick the stride-2 columns
    wm = _sliding_max(hm2, axis=1, window=POOL)                    # (Po_h, Wc-POOL+1)
    wcols = [wm[:, pj * STRIDE:pj * STRIDE + 1] for pj in range(Po_w)]
    pooled = jnp.concatenate(wcols, axis=1)                        # (Po_h, Po_w)

    # --- linear(1 -> 1), fused into a single slab store ---
    o_ref[...] = pooled * wlin_ref[0] + blin_ref[0]


def mynet_forward(x, w_conv, b_conv, w_lin, b_lin):
    """x: (N, 1, H, W) float32 (NCHW, as in PyTorch). Returns (N*Po_h*Po_w, 1)."""
    N, C, H, W = x.shape
    assert C == 1
    Hc, Wc = H + 2 - K + 1, W + 2 - K + 1
    assert Hc >= POOL and Wc >= POOL, "image too small for MaxPool2d(18)"
    Po_h = (Hc - POOL) // STRIDE + 1
    Po_w = (Wc - POOL) // STRIDE + 1

    x2 = x.reshape(N, H, W).astype(jnp.float32)

    out = pl.pallas_call(
        mynet_kernel,
        out_shape=jax.ShapeDtypeStruct((N, Po_h, Po_w), jnp.float32),
        grid=(N,),
        in_specs=[
            pl.BlockSpec((None, H, W), lambda n: (n, 0, 0)),
            pl.BlockSpec(memory_space=pltpu.MemorySpace.SMEM),
            pl.BlockSpec(memory_space=pltpu.MemorySpace.SMEM),
            pl.BlockSpec(memory_space=pltpu.MemorySpace.SMEM),
            pl.BlockSpec(memory_space=pltpu.MemorySpace.SMEM),
        ],
        out_specs=pl.BlockSpec((None, Po_h, Po_w), lambda n: (n, 0, 0)),
        scratch_shapes=[pltpu.VMEM((H + 2, W + 2), jnp.float32)],
        compiler_params=pltpu.CompilerParams(
            dimension_semantics=("parallel",)),
    )(
        x2,
        w_conv.reshape(-1).astype(jnp.float32),
        b_conv.reshape(-1).astype(jnp.float32),
        w_lin.reshape(-1).astype(jnp.float32),
        b_lin.reshape(-1).astype(jnp.float32),
    )

    # (N, Po_h, Po_w).reshape(-1, 1) == PyTorch (N, 1, Po_h, Po_w).reshape(-1, 1)
    return out.reshape(-1, 1)


def mynet_reference(x, w_conv, b_conv, w_lin, b_lin):
    """Pure-JAX reference for validation."""
    conv = lax.conv_general_dilated(
        x, w_conv, window_strides=(1, 1), padding=((1, 1), (1, 1)),
        dimension_numbers=("NCHW", "OIHW", "NCHW")) + b_conv.reshape(1, 1, 1, 1)
    pooled = lax.reduce_window(
        conv, -jnp.inf, lax.max,
        window_dimensions=(1, 1, POOL, POOL),
        window_strides=(1, 1, STRIDE, STRIDE),
        padding="VALID")
    flat = pooled.reshape(-1, 1)
    return flat * w_lin.reshape(1, 1) + b_lin.reshape(1,)


if __name__ == "__main__":
    key = jax.random.PRNGKey(0)
    kx, kw, kbc, kwl, kbl = jax.random.split(key, 5)

    # Small but valid shapes: H=W=24 -> conv out 22x22 -> pool out 3x3
    N, H, W = 2, 24, 24
    x = jax.random.normal(kx, (N, 1, H, W), dtype=jnp.float32)

    # Deterministic parameter init (same shapes as the PyTorch module)
    w_conv = jax.random.normal(kw, (1, 1, K, K), dtype=jnp.float32) * 0.1
    b_conv = jax.random.normal(kbc, (1,), dtype=jnp.float32) * 0.1
    w_lin = jax.random.normal(kwl, (1, 1), dtype=jnp.float32) * 0.5
    b_lin = jax.random.normal(kbl, (1,), dtype=jnp.float32) * 0.1

    y = jax.block_until_ready(mynet_forward(x, w_conv, b_conv, w_lin, b_lin))
    y_ref = mynet_reference(x, w_conv, b_conv, w_lin, b_lin)
    assert y.shape == (N * 3 * 3, 1), y.shape
    assert jnp.allclose(y, y_ref, atol=1e-4, rtol=1e-4), (y, y_ref)

    # Second, non-square config to exercise shape generality
    N2, H2, W2 = 3, 26, 30   # -> conv 24x28 -> pool 4x6
    x2 = jax.random.normal(jax.random.PRNGKey(1), (N2, 1, H2, W2), dtype=jnp.float32)
    y2 = jax.block_until_ready(mynet_forward(x2, w_conv, b_conv, w_lin, b_lin))
    y2_ref = mynet_reference(x2, w_conv, b_conv, w_lin, b_lin)
    assert y2.shape == y2_ref.shape, (y2.shape, y2_ref.shape)
    assert jnp.allclose(y2, y2_ref, atol=1e-4, rtol=1e-4), (y2, y2_ref)

    print("KERNEL_OK")
</pallas_src>

<mosaic_0001>
module attributes {stable_mosaic.version = 11 : i64} {
  func.func @mynet_kernel(%arg0: i32, %arg1: memref<1x24x24xf32, #tpu.memory_space<vmem>>, %arg2: memref<25xf32, #tpu.memory_space<smem>>, %arg3: memref<1xf32, #tpu.memory_space<smem>>, %arg4: memref<1xf32, #tpu.memory_space<smem>>, %arg5: memref<1xf32, #tpu.memory_space<smem>>, %arg6: memref<1x3x3xf32, #tpu.memory_space<vmem>>, %arg7: memref<26x26xf32, #tpu.memory_space<vmem>>) attributes {dimension_semantics = [#tpu.dimension_semantics<parallel>], iteration_bounds = array<i64: 2>, scalar_prefetch = 0 : i64, scratch_operands = 1 : i64, tpu.core_type = #tpu.core_type<tc>, window_params = [{transform_indices = @transform_0, window_bounds = array<i64: 1, 24, 24>}, {transform_indices = @transform_1, window_bounds = array<i64: 25>}, {transform_indices = @transform_2, window_bounds = array<i64: 1>}, {transform_indices = @transform_3, window_bounds = array<i64: 1>}, {transform_indices = @transform_4, window_bounds = array<i64: 1>}, {transform_indices = @transform_5, window_bounds = array<i64: 1, 3, 3>}]} {
    %cst = arith.constant 0.000000e+00 : f32
    %0 = vector.broadcast %cst : f32 to vector<26x26xf32>
    %c0 = arith.constant 0 : index
    %c0_0 = arith.constant 0 : index
    %1 = vector.load %arg7[%c0, %c0_0] : memref<26x26xf32, #tpu.memory_space<vmem>>, vector<26x26xf32>
    tpu.vector_store %arg7[%c0, %c0_0], %0 {strides = array<i32>} : memref<26x26xf32, #tpu.memory_space<vmem>>, vector<26x26xf32>,
    %c0_1 = arith.constant 0 : index
    %c0_2 = arith.constant 0 : index
    %c0_3 = arith.constant 0 : index
    %2 = vector.load %arg1[%c0_1, %c0_2, %c0_3] : memref<1x24x24xf32, #tpu.memory_space<vmem>>, vector<1x24x24xf32>
    %3 = vector.shape_cast %2 : vector<1x24x24xf32> to vector<24x24xf32>
    %c1 = arith.constant 1 : index
    %c1_4 = arith.constant 1 : index
    %4 = vector.load %arg7[%c1, %c1_4] : memref<26x26xf32, #tpu.memory_space<vmem>>, vector<24x24xf32>
    tpu.vector_store %arg7[%c1, %c1_4], %3 {strides = array<i32>} : memref<26x26xf32, #tpu.memory_space<vmem>>, vector<24x24xf32>,
    %c0_5 = arith.constant 0 : index
    %5 = memref.load %arg3[%c0_5] : memref<1xf32, #tpu.memory_space<smem>>
    %6 = vector.broadcast %5 : f32 to vector<22x22xf32>
    %c0_6 = arith.constant 0 : index
    %c0_7 = arith.constant 0 : index
    %7 = vector.load %arg7[%c0_6, %c0_7] : memref<26x26xf32, #tpu.memory_space<vmem>>, vector<22x22xf32>
    %c0_8 = arith.constant 0 : index
    %8 = memref.load %arg2[%c0_8] : memref<25xf32, #tpu.memory_space<smem>>
    %9 = vector.broadcast %8 : f32 to vector<22x22xf32>
    %10 = arith.mulf %7, %9 : vector<22x22xf32>
    %11 = arith.addf %6, %10 : vector<22x22xf32>
    %c0_9 = arith.constant 0 : index
    %c1_10 = arith.constant 1 : index
    %12 = vector.load %arg7[%c0_9, %c1_10] : memref<26x26xf32, #tpu.memory_space<vmem>>, vector<22x22xf32>
    %c1_11 = arith.constant 1 : index
    %13 = memref.load %arg2[%c1_11] : memref<25xf32, #tpu.memory_space<smem>>
    %14 = vector.broadcast %13 : f32 to vector<22x22xf32>
    %15 = arith.mulf %12, %14 : vector<22x22xf32>
    %16 = arith.addf %11, %15 : vector<22x22xf32>
    %c0_12 = arith.constant 0 : index
    %c2 = arith.constant 2 : index
    %17 = vector.load %arg7[%c0_12, %c2] : memref<26x26xf32, #tpu.memory_space<vmem>>, vector<22x22xf32>
    %c2_13 = arith.constant 2 : index
    %18 = memref.load %arg2[%c2_13] : memref<25xf32, #tpu.memory_space<smem>>
    %19 = vector.broadcast %18 : f32 to vector<22x22xf32>
    %20 = arith.mulf %17, %19 : vector<22x22xf32>
    %21 = arith.addf %16, %20 : vector<22x22xf32>
    %c0_14 = arith.constant 0 : index
    %c3 = arith.constant 3 : index
    %22 = vector.load %arg7[%c0_14, %c3] : memref<26x26xf32, #tpu.memory_space<vmem>>, vector<22x22xf32>
    %c3_15 = arith.constant 3 : index
    %23 = memref.load %arg2[%c3_15] : memref<25xf32, #tpu.memory_space<smem>>
    %24 = vector.broadcast %23 : f32 to vector<22x22xf32>
    %25 = arith.mulf %22, %24 : vector<22x22xf32>
    %26 = arith.addf %21, %25 : vector<22x22xf32>
    %c0_16 = arith.constant 0 : index
    %c4 = arith.constant 4 : index
    %27 = vector.load %arg7[%c0_16, %c4] : memref<26x26xf32, #tpu.memory_space<vmem>>, vector<22x22xf32>
    %c4_17 = arith.constant 4 : index
    %28 = memref.load %arg2[%c4_17] : memref<25xf32, #tpu.memory_space<smem>>
    %29 = vector.broadcast %28 : f32 to vector<22x22xf32>
    %30 = arith.mulf %27, %29 : vector<22x22xf32>
    %31 = arith.addf %26, %30 : vector<22x22xf32>
    %c1_18 = arith.constant 1 : index
    %c0_19 = arith.constant 0 : index
    %32 = vector.load %arg7[%c1_18, %c0_19] : memref<26x26xf32, #tpu.memory_space<vmem>>, vector<22x22xf32>
    %c5 = arith.constant 5 : index
    %33 = memref.load %arg2[%c5] : memref<25xf32, #tpu.memory_space<smem>>
    %34 = vector.broadcast %33 : f32 to vector<22x22xf32>
    %35 = arith.mulf %32, %34 : vector<22x22xf32>
    %36 = arith.addf %31, %35 : vector<22x22xf32>
    %c1_20 = arith.constant 1 : index
    %c1_21 = arith.constant 1 : index
    %37 = vector.load %arg7[%c1_20, %c1_21] : memref<26x26xf32, #tpu.memory_space<vmem>>, vector<22x22xf32>
    %c6 = arith.constant 6 : index
    %38 = memref.load %arg2[%c6] : memref<25xf32, #tpu.memory_space<smem>>
    %39 = vector.broadcast %38 : f32 to vector<22x22xf32>
    %40 = arith.mulf %37, %39 : vector<22x22xf32>
    %41 = arith.addf %36, %40 : vector<22x22xf32>
    %c1_22 = arith.constant 1 : index
    %c2_23 = arith.constant 2 : index
    %42 = vector.load %arg7[%c1_22, %c2_23] : memref<26x26xf32, #tpu.memory_space<vmem>>, vector<22x22xf32>
    %c7 = arith.constant 7 : index
    %43 = memref.load %arg2[%c7] : memref<25xf32, #tpu.memory_space<smem>>
    %44 = vector.broadcast %43 : f32 to vector<22x22xf32>
    %45 = arith.mulf %42, %44 : vector<22x22xf32>
    %46 = arith.addf %41, %45 : vector<22x22xf32>
    %c1_24 = arith.constant 1 : index
    %c3_25 = arith.constant 3 : index
    %47 = vector.load %arg7[%c1_24, %c3_25] : memref<26x26xf32, #tpu.memory_space<vmem>>, vector<22x22xf32>
    %c8 = arith.constant 8 : index
    %48 = memref.load %arg2[%c8] : memref<25xf32, #tpu.memory_space<smem>>
    %49 = vector.broadcast %48 : f32 to vector<22x22xf32>
    %50 = arith.mulf %47, %49 : vector<22x22xf32>
    %51 = arith.addf %46, %50 : vector<22x22xf32>
    %c1_26 = arith.constant 1 : index
    %c4_27 = arith.constant 4 : index
    %52 = vector.load %arg7[%c1_26, %c4_27] : memref<26x26xf32, #tpu.memory_space<vmem>>, vector<22x22xf32>
    %c9 = arith.constant 9 : index
    %53 = memref.load %arg2[%c9] : memref<25xf32, #tpu.memory_space<smem>>
    %54 = vector.broadcast %53 : f32 to vector<22x22xf32>
    %55 = arith.mulf %52, %54 : vector<22x22xf32>
    %56 = arith.addf %51, %55 : vector<22x22xf32>
    %c2_28 = arith.constant 2 : index
    %c0_29 = arith.constant 0 : index
    %57 = vector.load %arg7[%c2_28, %c0_29] : memref<26x26xf32, #tpu.memory_space<vmem>>, vector<22x22xf32>
    %c10 = arith.constant 10 : index
    %58 = memref.load %arg2[%c10] : memref<25xf32, #tpu.memory_space<smem>>
    %59 = vector.broadcast %58 : f32 to vector<22x22xf32>
    %60 = arith.mulf %57, %59 : vector<22x22xf32>
    %61 = arith.addf %56, %60 : vector<22x22xf32>
    %c2_30 = arith.constant 2 : index
    %c1_31 = arith.constant 1 : index
    %62 = vector.load %arg7[%c2_30, %c1_31] : memref<26x26xf32, #tpu.memory_space<vmem>>, vector<22x22xf32>
    %c11 = arith.constant 11 : index
    %63 = memref.load %arg2[%c11] : memref<25xf32, #tpu.memory_space<smem>>
    %64 = vector.broadcast %63 : f32 to vector<22x22xf32>
    %65 = arith.mulf %62, %64 : vector<22x22xf32>
    %66 = arith.addf %61, %65 : vector<22x22xf32>
    %c2_32 = arith.constant 2 : index
    %c2_33 = arith.constant 2 : index
    %67 = vector.load %arg7[%c2_32, %c2_33] : memref<26x26xf32, #tpu.memory_space<vmem>>, vector<22x22xf32>
    %c12 = arith.constant 12 : index
    %68 = memref.load %arg2[%c12] : memref<25xf32, #tpu.memory_space<smem>>
    %69 = vector.broadcast %68 : f32 to vector<22x22xf32>
    %70 = arith.mulf %67, %69 : vector<22x22xf32>
    %71 = arith.addf %66, %70 : vector<22x22xf32>
    %c2_34 = arith.constant 2 : index
    %c3_35 = arith.constant 3 : index
    %72 = vector.load %arg7[%c2_34, %c3_35] : memref<26x26xf32, #tpu.memory_space<vmem>>, vector<22x22xf32>
    %c13 = arith.constant 13 : index
    %73 = memref.load %arg2[%c13] : memref<25xf32, #tpu.memory_space<smem>>
    %74 = vector.broadcast %73 : f32 to vector<22x22xf32>
    %75 = arith.mulf %72, %74 : vector<22x22xf32>
    %76 = arith.addf %71, %75 : vector<22x22xf32>
    %c2_36 = arith.constant 2 : index
    %c4_37 = arith.constant 4 : index
    %77 = vector.load %arg7[%c2_36, %c4_37] : memref<26x26xf32, #tpu.memory_space<vmem>>, vector<22x22xf32>
    %c14 = arith.constant 14 : index
    %78 = memref.load %arg2[%c14] : memref<25xf32, #tpu.memory_space<smem>>
    %79 = vector.broadcast %78 : f32 to vector<22x22xf32>
    %80 = arith.mulf %77, %79 : vector<22x22xf32>
    %81 = arith.addf %76, %80 : vector<22x22xf32>
    %c3_38 = arith.constant 3 : index
    %c0_39 = arith.constant 0 : index
    %82 = vector.load %arg7[%c3_38, %c0_39] : memref<26x26xf32, #tpu.memory_space<vmem>>, vector<22x22xf32>
    %c15 = arith.constant 15 : index
    %83 = memref.load %arg2[%c15] : memref<25xf32, #tpu.memory_space<smem>>
    %84 = vector.broadcast %83 : f32 to vector<22x22xf32>
    %85 = arith.mulf %82, %84 : vector<22x22xf32>
    %86 = arith.addf %81, %85 : vector<22x22xf32>
    %c3_40 = arith.constant 3 : index
    %c1_41 = arith.constant 1 : index
    %87 = vector.load %arg7[%c3_40, %c1_41] : memref<26x26xf32, #tpu.memory_space<vmem>>, vector<22x22xf32>
    %c16 = arith.constant 16 : index
    %88 = memref.load %arg2[%c16] : memref<25xf32, #tpu.memory_space<smem>>
    %89 = vector.broadcast %88 : f32 to vector<22x22xf32>
    %90 = arith.mulf %87, %89 : vector<22x22xf32>
    %91 = arith.addf %86, %90 : vector<22x22xf32>
    %c3_42 = arith.constant 3 : index
    %c2_43 = arith.constant 2 : index
    %92 = vector.load %arg7[%c3_42, %c2_43] : memref<26x26xf32, #tpu.memory_space<vmem>>, vector<22x22xf32>
    %c17 = arith.constant 17 : index
    %93 = memref.load %arg2[%c17] : memref<25xf32, #tpu.memory_space<smem>>
    %94 = vector.broadcast %93 : f32 to vector<22x22xf32>
    %95 = arith.mulf %92, %94 : vector<22x22xf32>
    %96 = arith.addf %91, %95 : vector<22x22xf32>
    %c3_44 = arith.constant 3 : index
    %c3_45 = arith.constant 3 : index
    %97 = vector.load %arg7[%c3_44, %c3_45] : memref<26x26xf32, #tpu.memory_space<vmem>>, vector<22x22xf32>
    %c18 = arith.constant 18 : index
    %98 = memref.load %arg2[%c18] : memref<25xf32, #tpu.memory_space<smem>>
    %99 = vector.broadcast %98 : f32 to vector<22x22xf32>
    %100 = arith.mulf %97, %99 : vector<22x22xf32>
    %101 = arith.addf %96, %100 : vector<22x22xf32>
    %c3_46 = arith.constant 3 : index
    %c4_47 = arith.constant 4 : index
    %102 = vector.load %arg7[%c3_46, %c4_47] : memref<26x26xf32, #tpu.memory_space<vmem>>, vector<22x22xf32>
    %c19 = arith.constant 19 : index
    %103 = memref.load %arg2[%c19] : memref<25xf32, #tpu.memory_space<smem>>
    %104 = vector.broadcast %103 : f32 to vector<22x22xf32>
    %105 = arith.mulf %102, %104 : vector<22x22xf32>
    %106 = arith.addf %101, %105 : vector<22x22xf32>
    %c4_48 = arith.constant 4 : index
    %c0_49 = arith.constant 0 : index
    %107 = vector.load %arg7[%c4_48, %c0_49] : memref<26x26xf32, #tpu.memory_space<vmem>>, vector<22x22xf32>
    %c20 = arith.constant 20 : index
    %108 = memref.load %arg2[%c20] : memref<25xf32, #tpu.memory_space<smem>>
    %109 = vector.broadcast %108 : f32 to vector<22x22xf32>
    %110 = arith.mulf %107, %109 : vector<22x22xf32>
    %111 = arith.addf %106, %110 : vector<22x22xf32>
    %c4_50 = arith.constant 4 : index
    %c1_51 = arith.constant 1 : index
    %112 = vector.load %arg7[%c4_50, %c1_51] : memref<26x26xf32, #tpu.memory_space<vmem>>, vector<22x22xf32>
    %c21 = arith.constant 21 : index
    %113 = memref.load %arg2[%c21] : memref<25xf32, #tpu.memory_space<smem>>
    %114 = vector.broadcast %113 : f32 to vector<22x22xf32>
    %115 = arith.mulf %112, %114 : vector<22x22xf32>
    %116 = arith.addf %111, %115 : vector<22x22xf32>
    %c4_52 = arith.constant 4 : index
    %c2_53 = arith.constant 2 : index
    %117 = vector.load %arg7[%c4_52, %c2_53] : memref<26x26xf32, #tpu.memory_space<vmem>>, vector<22x22xf32>
    %c22 = arith.constant 22 : index
    %118 = memref.load %arg2[%c22] : memref<25xf32, #tpu.memory_space<smem>>
    %119 = vector.broadcast %118 : f32 to vector<22x22xf32>
    %120 = arith.mulf %117, %119 : vector<22x22xf32>
    %121 = arith.addf %116, %120 : vector<22x22xf32>
    %c4_54 = arith.constant 4 : index
    %c3_55 = arith.constant 3 : index
    %122 = vector.load %arg7[%c4_54, %c3_55] : memref<26x26xf32, #tpu.memory_space<vmem>>, vector<22x22xf32>
    %c23 = arith.constant 23 : index
    %123 = memref.load %arg2[%c23] : memref<25xf32, #tpu.memory_space<smem>>
    %124 = vector.broadcast %123 : f32 to vector<22x22xf32>
    %125 = arith.mulf %122, %124 : vector<22x22xf32>
    %126 = arith.addf %121, %125 : vector<22x22xf32>
    %c4_56 = arith.constant 4 : index
    %c4_57 = arith.constant 4 : index
    %127 = vector.load %arg7[%c4_56, %c4_57] : memref<26x26xf32, #tpu.memory_space<vmem>>, vector<22x22xf32>
    %c24 = arith.constant 24 : index
    %128 = memref.load %arg2[%c24] : memref<25xf32, #tpu.memory_space<smem>>
    %129 = vector.broadcast %128 : f32 to vector<22x22xf32>
    %130 = arith.mulf %127, %129 : vector<22x22xf32>
    %131 = arith.addf %126, %130 : vector<22x22xf32>
    %132 = vector.extract_strided_slice %131 {offsets = [0, 0], sizes = [21, 22], strides = [1, 1]} : vector<22x22xf32> to vector<21x22xf32>
    %133 = vector.extract_strided_slice %131 {offsets = [1, 0], sizes = [21, 22], strides = [1, 1]} : vector<22x22xf32> to vector<21x22xf32>
    %134 = arith.maximumf %132, %133 : vector<21x22xf32>
    %135 = vector.extract_strided_slice %134 {offsets = [0, 0], sizes = [19, 22], strides = [1, 1]} : vector<21x22xf32> to vector<19x22xf32>
    %136 = vector.extract_strided_slice %134 {offsets = [2, 0], sizes = [19, 22], strides = [1, 1]} : vector<21x22xf32> to vector<19x22xf32>
    %137 = arith.maximumf %135, %136 : vector<19x22xf32>
    %138 = vector.extract_strided_slice %137 {offsets = [0, 0], sizes = [15, 22], strides = [1, 1]} : vector<19x22xf32> to vector<15x22xf32>
    %139 = vector.extract_strided_slice %137 {offsets = [4, 0], sizes = [15, 22], strides = [1, 1]} : vector<19x22xf32> to vector<15x22xf32>
    %140 = arith.maximumf %138, %139 : vector<15x22xf32>
    %141 = vector.extract_strided_slice %140 {offsets = [0, 0], sizes = [7, 22], strides = [1, 1]} : vector<15x22xf32> to vector<7x22xf32>
    %142 = vector.extract_strided_slice %140 {offsets = [8, 0], sizes = [7, 22], strides = [1, 1]} : vector<15x22xf32> to vector<7x22xf32>
    %143 = arith.maximumf %141, %142 : vector<7x22xf32>
    %144 = vector.extract_strided_slice %143 {offsets = [0, 0], sizes = [5, 22], strides = [1, 1]} : vector<7x22xf32> to vector<5x22xf32>
    %145 = vector.extract_strided_slice %143 {offsets = [2, 0], sizes = [5, 22], strides = [1, 1]} : vector<7x22xf32> to vector<5x22xf32>
    %146 = arith.maximumf %144, %145 : vector<5x22xf32>
    %147 = vector.extract_strided_slice %146 {offsets = [0, 0], sizes = [1, 22], strides = [1, 1]} : vector<5x22xf32> to vector<1x22xf32>
    %148 = vector.extract_strided_slice %146 {offsets = [2, 0], sizes = [1, 22], strides = [1, 1]} : vector<5x22xf32> to vector<1x22xf32>
    %149 = vector.extract_strided_slice %146 {offsets = [4, 0], sizes = [1, 22], strides = [1, 1]} : vector<5x22xf32> to vector<1x22xf32>
    %150 = tpu.concatenate %147, %148, %149 in 0 : vector<1x22xf32>, vector<1x22xf32>, vector<1x22xf32> -> vector<3x22xf32>
    %151 = vector.extract_strided_slice %150 {offsets = [0, 0], sizes = [3, 21], strides = [1, 1]} : vector<3x22xf32> to vector<3x21xf32>
    %152 = vector.extract_strided_slice %150 {offsets = [0, 1], sizes = [3, 21], strides = [1, 1]} : vector<3x22xf32> to vector<3x21xf32>
    %153 = arith.maximumf %151, %152 : vector<3x21xf32>
    %154 = vector.extract_strided_slice %153 {offsets = [0, 0], sizes = [3, 19], strides = [1, 1]} : vector<3x21xf32> to vector<3x19xf32>
    %155 = vector.extract_strided_slice %153 {offsets = [0, 2], sizes = [3, 19], strides = [1, 1]} : vector<3x21xf32> to vector<3x19xf32>
    %156 = arith.maximumf %154, %155 : vector<3x19xf32>
    %157 = vector.extract_strided_slice %156 {offsets = [0, 0], sizes = [3, 15], strides = [1, 1]} : vector<3x19xf32> to vector<3x15xf32>
    %158 = vector.extract_strided_slice %156 {offsets = [0, 4], sizes = [3, 15], strides = [1, 1]} : vector<3x19xf32> to vector<3x15xf32>
    %159 = arith.maximumf %157, %158 : vector<3x15xf32>
    %160 = vector.extract_strided_slice %159 {offsets = [0, 0], sizes = [3, 7], strides = [1, 1]} : vector<3x15xf32> to vector<3x7xf32>
    %161 = vector.extract_strided_slice %159 {offsets = [0, 8], sizes = [3, 7], strides = [1, 1]} : vector<3x15xf32> to vector<3x7xf32>
    %162 = arith.maximumf %160, %161 : vector<3x7xf32>
    %163 = vector.extract_strided_slice %162 {offsets = [0, 0], sizes = [3, 5], strides = [1, 1]} : vector<3x7xf32> to vector<3x5xf32>
    %164 = vector.extract_strided_slice %162 {offsets = [0, 2], sizes = [3, 5], strides = [1, 1]} : vector<3x7xf32> to vector<3x5xf32>
    %165 = arith.maximumf %163, %164 : vector<3x5xf32>
    %166 = vector.extract_strided_slice %165 {offsets = [0, 0], sizes = [3, 1], strides = [1, 1]} : vector<3x5xf32> to vector<3x1xf32>
    %167 = vector.extract_strided_slice %165 {offsets = [0, 2], sizes = [3, 1], strides = [1, 1]} : vector<3x5xf32> to vector<3x1xf32>
    %168 = vector.extract_strided_slice %165 {offsets = [0, 4], sizes = [3, 1], strides = [1, 1]} : vector<3x5xf32> to vector<3x1xf32>
    %169 = tpu.concatenate %166, %167, %168 in 1 : vector<3x1xf32>, vector<3x1xf32>, vector<3x1xf32> -> vector<3x3xf32>
    %c0_58 = arith.constant 0 : index
    %170 = memref.load %arg4[%c0_58] : memref<1xf32, #tpu.memory_space<smem>>
    %171 = vector.broadcast %170 : f32 to vector<3x3xf32>
    %172 = arith.mulf %169, %171 : vector<3x3xf32>
    %c0_59 = arith.constant 0 : index
    %173 = memref.load %arg5[%c0_59] : memref<1xf32, #tpu.memory_space<smem>>
    %174 = vector.broadcast %173 : f32 to vector<3x3xf32>
    %175 = arith.addf %172, %174 : vector<3x3xf32>
    %c0_60 = arith.constant 0 : index
    %c0_61 = arith.constant 0 : index
    %c0_62 = arith.constant 0 : index
    %176 = vector.load %arg6[%c0_60, %c0_61, %c0_62] : memref<1x3x3xf32, #tpu.memory_space<vmem>>, vector<1x3x3xf32>
    %177 = vector.shape_cast %176 : vector<1x3x3xf32> to vector<3x3xf32>
    %178 = vector.shape_cast %175 : vector<3x3xf32> to vector<1x3x3xf32>
    tpu.vector_store %arg6[%c0_60, %c0_61, %c0_62], %178 {strides = array<i32>} : memref<1x3x3xf32, #tpu.memory_space<vmem>>, vector<1x3x3xf32>,
    return
  }
  func.func @transform_0(%arg0: i32) -> (i32, i32, i32) {
    %c0_i32 = arith.constant 0 : i32
    %c0_i32_0 = arith.constant 0 : i32
    %c0_i32_1 = arith.constant 0 : i32
    return %arg0, %c0_i32, %c0_i32_0 : i32, i32, i32
  }
  func.func @transform_1(%arg0: i32) -> i32 {
    %c0_i32 = arith.constant 0 : i32
    %c0_i32_0 = arith.constant 0 : i32
    return %c0_i32 : i32
  }
  func.func @transform_2(%arg0: i32) -> i32 {
    %c0_i32 = arith.constant 0 : i32
    %c0_i32_0 = arith.constant 0 : i32
    return %c0_i32 : i32
  }
  func.func @transform_3(%arg0: i32) -> i32 {
    %c0_i32 = arith.constant 0 : i32
    %c0_i32_0 = arith.constant 0 : i32
    return %c0_i32 : i32
  }
  func.func @transform_4(%arg0: i32) -> i32 {
    %c0_i32 = arith.constant 0 : i32
    %c0_i32_0 = arith.constant 0 : i32
    return %c0_i32 : i32
  }
  func.func @transform_5(%arg0: i32) -> (i32, i32, i32) {
    %c0_i32 = arith.constant 0 : i32
    %c0_i32_0 = arith.constant 0 : i32
    %c0_i32_1 = arith.constant 0 : i32
    return %arg0, %c0_i32, %c0_i32_0 : i32, i32, i32
  }
}

</mosaic_0001>

<llo_original>
// kernel: tpu_custom_call.1
$region0: #{tpu_custom_call.1}
  #allocation0 [shape = 'u32[]', space=smem, size = 0x4, offset = 0x4, fixed_abs, tag = 'smem constant byte address 0x4 - core index']
  #allocation1 [shape = 'u32[144,128]{1,0:T(1,128)}', space=vmem, size = 0x12000, scoped, tag = 'internal scratch']
  #allocation2 [shape = 'f32[26,26]{1,0:T(8,128)}', space=vmem, size = 0x4000, scoped, tag = 'scratch operand']
  #allocation3 [shape = 'f32[1]{0:T(128)S(6)}', space=smem, size = 0x200, scoped, tag = 'scoped memory for tpu_custom_call.1']
  #allocation4 [shape = 'f32[1]{0:T(128)S(6)}', space=smem, size = 0x200, scoped, tag = 'scoped memory for tpu_custom_call.1']
  #allocation5 [shape = 'f32[1]{0:T(128)S(6)}', space=smem, size = 0x200, scoped, tag = 'scoped memory for tpu_custom_call.1']
  %s0 = inlined_call_operand.hbm [shape: f32[2,24,24], index: 0, kind: input, shape index: {}]
  %s1 = inlined_call_operand.vmem [shape: f32[25], index: 1, kind: input, shape index: {}]
  %s2 = inlined_call_operand.<no memory space> [shape: f32[1], index: 2, kind: input, shape index: {}]
  %s3 = inlined_call_operand.<no memory space> [shape: f32[1], index: 3, kind: input, shape index: {}]
  %s4 = inlined_call_operand.<no memory space> [shape: f32[1], index: 4, kind: input, shape index: {}]
  %s5 = inlined_call_operand.vmem [shape: f32[2,3,3], index: 5, kind: output, shape index: {}]
  %s6 = sld [smem:[#allocation0]]
  $region61: #{tpu_custom_call.1} parent=0
    _
  %s8 = ssub.s32 1, %s6
  %s9 = scalar_select 0, %s8, %s6
  %10 = sst [smem:[#allocation3]] %s2
  %11 = sst [smem:[#allocation4]] %s3
  %12 = sst [smem:[#allocation5]] %s4
  $region1: #{tpu_custom_call.1} parent=0
    #allocation6 [shape = 'u8[24576]{0}', space=vmem, size = 0x6000, scoped, tag = 'input window, operand 0']
    #allocation7 [shape = 's32[2]{0}', space=sflag, size = 0x8, scoped, tag = 'scoped memory for tpu_custom_call.1']
    #allocation8 [shape = 's32[2]{0}', space=sflag, size = 0x8, scoped, tag = 'scoped memory for tpu_custom_call.1']
    #allocation9 [shape = 'u8[512]{0}', space=smem, size = 0x200, scoped, tag = 'input window, operand 1, single buffered']
    %13 = vsyncpa [#allocation7], 0
    %s14 = scalar_lea.sflag [#allocation7], 1
    %15 = vsyncpa %s14, 0
    %16 = vsyncpa [#allocation8], 0
    loop: start=0, step=1, limit=4
    $region2: #{tpu_custom_call.1} parent=1 // loop_pre_header
      _
    $region3: #{tpu_custom_call.1} parent=1 // loop_header
      %s18 = sphi 0, %s22
      %p19 = scmp.ge.s32.totalorder %s18, 4
      %s28 = sphi 0, %s30
      %s31 = sphi 0, %s28
      %s32 = sphi 0, %s31
      %s48 = sphi 0, %s32
      %s52 = sphi 0, %s52
      %s54 = sphi 0, %s52
      %s55 = sphi 0, %s54
      %s69 = sphi 0, %s55
      %s73 = sphi 0, %s73
      %s75 = sphi 0, %s73
      %s76 = sphi 0, %s75
      %s90 = sphi 0, %s76
      %s94 = sphi 0, %s94
      %s96 = sphi 0, %s94
      %s97 = sphi 0, %s96
      %s111 = sphi 0, %s97
      %s115 = sphi 0, %s115
      %s117 = sphi 0, %s115
      %s118 = sphi 0, %s117
      %s132 = sphi 0, %s118
      %s138 = sphi 0, %s140
      %s141 = sphi 0, %s138
      %s142 = sphi 0, %s141
      %s158 = sphi 0, %s142
    $region4: #{tpu_custom_call.1} parent=1 // loop_header_branch
      %21 = sbr.rel (%p19) target = $region8
    $region5: #{tpu_custom_call.1} parent=1 // loop_body
      %s23 = ssub.s32 %s18, 1
      %s24 = ssub.s32 %s18, 2
      %s25 = sadd.s32 %s18, 1
      %s26 = ssub.s32 %s18, %s25
      %p27 = scmp.eq.s32.totalorder %s26, 0
      %s29 = sadd.s32 %s28, 1
      %s30 = scalar_select %p27, %s28, %s29
      %p33 = pneg %p27
      %p34 = scmp.eq.s32.totalorder %s18, 1
      %p35 = por %p33, %p34
      %p36 = scmp.ne.s32.totalorder %s28, %s31
      %p37 = scmp.eq.s32.totalorder %s18, 0
      %p38 = por %p36, %p37
      %p39 = scmp.ne.s32.totalorder %s28, %s31
      %p40 = scmp.eq.s32.totalorder %s23, 1
      %p41 = por %p39, %p40
      %p42 = scmp.ne.s32.totalorder %s31, %s32
      %p43 = scmp.eq.s32.totalorder %s23, 0
      %p44 = por %p42, %p43
      %p45 = scmp.ne.s32.totalorder %s31, %s32
      %p46 = scmp.eq.s32.totalorder %s24, 1
      %p47 = por %p45, %p46
      %p49 = scmp.ne.s32.totalorder %s32, %s48
      %p50 = scmp.eq.s32.totalorder %s24, 0
      %p51 = por %p49, %p50
      %s53 = sadd.s32 %s52, 1
      %p56 = scmp.eq.s32.totalorder %s18, 1
      %p57 = scmp.ne.s32.totalorder %s52, %s54
      %p58 = scmp.eq.s32.totalorder %s18, 0
      %p59 = por %p57, %p58
      %p60 = scmp.ne.s32.totalorder %s52, %s54
      %p61 = scmp.eq.s32.totalorder %s23, 1
      %p62 = por %p60, %p61
      %p63 = scmp.ne.s32.totalorder %s54, %s55
      %p64 = scmp.eq.s32.totalorder %s23, 0
      %p65 = por %p63, %p64
      %p66 = scmp.ne.s32.totalorder %s54, %s55
      %p67 = scmp.eq.s32.totalorder %s24, 1
      %p68 = por %p66, %p67
      %p70 = scmp.ne.s32.totalorder %s55, %s69
      %p71 = scmp.eq.s32.totalorder %s24, 0
      %p72 = por %p70, %p71
      %s74 = sadd.s32 %s73, 1
      %p77 = scmp.eq.s32.totalorder %s18, 1
      %p78 = scmp.ne.s32.totalorder %s73, %s75
      %p79 = scmp.eq.s32.totalorder %s18, 0
      %p80 = por %p78, %p79
      %p81 = scmp.ne.s32.totalorder %s73, %s75
      %p82 = scmp.eq.s32.totalorder %s23, 1
      %p83 = por %p81, %p82
      %p84 = scmp.ne.s32.totalorder %s75, %s76
      %p85 = scmp.eq.s32.totalorder %s23, 0
      %p86 = por %p84, %p85
      %p87 = scmp.ne.s32.totalorder %s75, %s76
      %p88 = scmp.eq.s32.totalorder %s24, 1
      %p89 = por %p87, %p88
      %p91 = scmp.ne.s32.totalorder %s76, %s90
      %p92 = scmp.eq.s32.totalorder %s24, 0
      %p93 = por %p91, %p92
      %s95 = sadd.s32 %s94, 1
      %p98 = scmp.eq.s32.totalorder %s18, 1
      %p99 = scmp.ne.s32.totalorder %s94, %s96
      %p100 = scmp.eq.s32.totalorder %s18, 0
      %p101 = por %p99, %p100
      %p102 = scmp.ne.s32.totalorder %s94, %s96
      %p103 = scmp.eq.s32.totalorder %s23, 1
      %p104 = por %p102, %p103
      %p105 = scmp.ne.s32.totalorder %s96, %s97
      %p106 = scmp.eq.s32.totalorder %s23, 0
      %p107 = por %p105, %p106
      %p108 = scmp.ne.s32.totalorder %s96, %s97
      %p109 = scmp.eq.s32.totalorder %s24, 1
      %p110 = por %p108, %p109
      %p112 = scmp.ne.s32.totalorder %s97, %s111
      %p113 = scmp.eq.s32.totalorder %s24, 0
      %p114 = por %p112, %p113
      %s116 = sadd.s32 %s115, 1
      %p119 = scmp.eq.s32.totalorder %s18, 1
      %p120 = scmp.ne.s32.totalorder %s115, %s117
      %p121 = scmp.eq.s32.totalorder %s18, 0
      %p122 = por %p120, %p121
      %p123 = scmp.ne.s32.totalorder %s115, %s117
      %p124 = scmp.eq.s32.totalorder %s23, 1
      %p125 = por %p123, %p124
      %p126 = scmp.ne.s32.totalorder %s117, %s118
      %p127 = scmp.eq.s32.totalorder %s23, 0
      %p128 = por %p126, %p127
      %p129 = scmp.ne.s32.totalorder %s117, %s118
      %p130 = scmp.eq.s32.totalorder %s24, 1
      %p131 = por %p129, %p130
      %p133 = scmp.ne.s32.totalorder %s118, %s132
      %p134 = scmp.eq.s32.totalorder %s24, 0
      %p135 = por %p133, %p134
      %s136 = ssub.s32 %s18, %s25
      %p137 = scmp.eq.s32.totalorder %s136, 0
      %s139 = sadd.s32 %s138, 1
      %s140 = scalar_select %p137, %s138, %s139
      %p143 = pneg %p137
      %p144 = scmp.eq.s32.totalorder %s18, 1
      %p145 = por %p143, %p144
      %p146 = scmp.ne.s32.totalorder %s138, %s141
      %p147 = scmp.eq.s32.totalorder %s18, 0
      %p148 = por %p146, %p147
      %p149 = scmp.ne.s32.totalorder %s138, %s141
      %p150 = scmp.eq.s32.totalorder %s23, 1
      %p151 = por %p149, %p150
      %p152 = scmp.ne.s32.totalorder %s141, %s142
      %p153 = scmp.eq.s32.totalorder %s23, 0
      %p154 = por %p152, %p153
      %p155 = scmp.ne.s32.totalorder %s141, %s142
      %p156 = scmp.eq.s32.totalorder %s24, 1
      %p157 = por %p155, %p156
      %p159 = scmp.ne.s32.totalorder %s142, %s158
      %p160 = scmp.eq.s32.totalorder %s24, 0
      %p161 = por %p159, %p160
      %p162 = scmp.le.s32.totalorder 1, %s18
      %p163 = scmp.lt.s32.totalorder %s18, 3
      %p164 = pnand %p162, %p163
      %p165 = pneg %p164
      // Predicated region
      $region9: #{tpu_custom_call.1} parent=5 // pred_check
        _
      $region10: #{tpu_custom_call.1} parent=5 // pred_check_branch
        %167 = sbr.rel (%p164) target = $region12
      $region11: #{tpu_custom_call.1} parent=5 // pred_region
        %s168 = ssub.s32 %s18, 1
        // Predicated region
        $region13: #{tpu_custom_call.1} parent=11 // pred_check
          %p169 = pneg %p65
        $region14: #{tpu_custom_call.1} parent=11 // pred_check_branch
          %171 = sbr.rel (%p169) target = $region16
        $region15: #{tpu_custom_call.1} parent=11 // pred_region
          %s173 = ssub.s32 16, 16
          %174 = vsyncadd [#allocation8], %s173
          %s176 = sshll.u32 %s1, 4
          %s177 = int_to_ptr.vmem [resolvable:$true] %s176
          %179 = dma.vmem_to_smem %s177, 16, [#allocation9], [#allocation8]
        $region16: #{tpu_custom_call.1} parent=11 // pred_fallthru
          _
        // Predicated region
        $region17: #{tpu_custom_call.1} parent=11 // pred_check
          %p180 = pneg %p86
        $region18: #{tpu_custom_call.1} parent=11 // pred_check_branch
          %182 = sbr.rel (%p180) target = $region20
        $region19: #{tpu_custom_call.1} parent=11 // pred_region
          _
        $region20: #{tpu_custom_call.1} parent=11 // pred_fallthru
          _
        // Predicated region
        $region21: #{tpu_custom_call.1} parent=11 // pred_check
          %p183 = pneg %p107
        $region22: #{tpu_custom_call.1} parent=11 // pred_check_branch
          %185 = sbr.rel (%p183) target = $region24
        $region23: #{tpu_custom_call.1} parent=11 // pred_region
          _
        $region24: #{tpu_custom_call.1} parent=11 // pred_fallthru
          _
        // Predicated region
        $region25: #{tpu_custom_call.1} parent=11 // pred_check
          %p186 = pneg %p128
        $region26: #{tpu_custom_call.1} parent=11 // pred_check_branch
          %188 = sbr.rel (%p186) target = $region28
        $region27: #{tpu_custom_call.1} parent=11 // pred_region
          _
        $region28: #{tpu_custom_call.1} parent=11 // pred_fallthru
          _
      $region12: #{tpu_custom_call.1} parent=5 // pred_fallthru
        _
      %p189 = scmp.lt.s32.totalorder %s18, 2
      // Predicated region
      $region29: #{tpu_custom_call.1} parent=5 // pred_check
        %p190 = pneg %p189
      $region30: #{tpu_custom_call.1} parent=5 // pred_check_branch
        %192 = sbr.rel (%p190) target = $region32
      $region31: #{tpu_custom_call.1} parent=5 // pred_region
        // Predicated region
        $region33: #{tpu_custom_call.1} parent=31 // pred_check
          %p193 = pneg %p38
        $region34: #{tpu_custom_call.1} parent=31 // pred_check_branch
          %195 = sbr.rel (%p193) target = $region36
        $region35: #{tpu_custom_call.1} parent=31 // pred_region
          %s196 = sand.u32 %s28, 1
          %s197 = scalar_lea.sflag [#allocation7], %s196
          %s198 = sand.u32 %s28, 1
          %s199 = smul.addr %s198, 24
          %s200 = scalar_lea.vmem [#allocation6], %s199
          %s202 = ssub.s32 384, 384
          %203 = vsyncadd %s197, %s202
          %s204 = smul.addr %s18, 3
          %s205 = smul.addr %s204, 128
          %s206 = scalar_lea.hbm %s0, %s205
          %s207 = sshll.u32 %s200, 4
          %s208 = int_to_ptr.vmem [resolvable:$true] %s207
          %213 = dma.hbm_to_vmem [thread:$0]  %s206, 384, %s208, %s197, 128, 128, 8
        $region36: #{tpu_custom_call.1} parent=31 // pred_fallthru
          _
      $region32: #{tpu_custom_call.1} parent=5 // pred_fallthru
        _
      %p214 = scmp.le.s32.totalorder 1, %s18
      %p215 = scmp.lt.s32.totalorder %s18, 3
      %p216 = pnand %p214, %p215
      %p217 = pneg %p216
      // Predicated region
      $region37: #{tpu_custom_call.1} parent=5 // pred_check
        _
      $region38: #{tpu_custom_call.1} parent=5 // pred_check_branch
        %219 = sbr.rel (%p216) target = $region40
      $region39: #{tpu_custom_call.1} parent=5 // pred_region
        %s220 = ssub.s32 %s18, 1
        %s221 = sand.u32 %s31, 1
        %s222 = scalar_lea.sflag [#allocation7], %s221
        %s223 = sand.u32 %s31, 1
        %s224 = smul.addr %s223, 24
        %s225 = scalar_lea.vmem [#allocation6], %s224
        // Predicated region
        $region41: #{tpu_custom_call.1} parent=39 // pred_check
          %p226 = pneg %p44
        $region42: #{tpu_custom_call.1} parent=39 // pred_check_branch
          %228 = sbr.rel (%p226) target = $region44
        $region43: #{tpu_custom_call.1} parent=39 // pred_region
          %229 = dma.done %s222, 384
        $region44: #{tpu_custom_call.1} parent=39 // pred_fallthru
          _
        // Predicated region
        $region45: #{tpu_custom_call.1} parent=39 // pred_check
          %p230 = pneg %p65
        $region46: #{tpu_custom_call.1} parent=39 // pred_check_branch
          %232 = sbr.rel (%p230) target = $region48
        $region47: #{tpu_custom_call.1} parent=39 // pred_region
          %233 = dma.done [#allocation8], 16
        $region48: #{tpu_custom_call.1} parent=39 // pred_fallthru
          _
        %234 = sfence
        %s235 = sand.u32 %s31, 1
        %s236 = scalar_lea.sflag [#allocation7], %s235
        %s237 = sand.u32 %s31, 1
        %s238 = smul.addr %s237, 24
        %s239 = scalar_lea.vmem [#allocation6], %s238
        %p240 = pneg %p44
        %p241 = pneg %p41
        %p242 = pneg %p65
        %p243 = pneg %p62
        %p244 = pneg %p86
        %p245 = pneg %p83
        %p246 = pneg %p107
        %p247 = pneg %p104
        %p248 = pneg %p128
        %p249 = pneg %p125
        %p250 = pneg %p154
        %p251 = pneg %p151
        %p252 = scmp.lt.s32.totalorder %s23, 1
        %s253 = scalar_select %p252, %s23, 1
        %s254 = smul.addr %s253, 4
        %s255 = scalar_lea.vmem %s5, %s254
        %p256 = scmp.lt.s32.totalorder %s23, 1
        %s257 = scalar_select %p256, %s23, 1
        %s258 = smul.addr %s257, 4
        %s259 = scalar_lea.vmem %s5, %s258
        %vm260 = vcmask 211968
        %261 = vst.msk [vmem:[#allocation2] sm:$0xff] %vm260, 0.0
        %262 = vst.msk [vmem:[#allocation2 + $0x8] sm:$0xff] %vm260, 0.0
        %263 = vst.msk [vmem:[#allocation2 + $0x10] sm:$0xff] %vm260, 0.0
        %vm264 = vcmask 205824
        %265 = vst.msk [vmem:[#allocation2 + $0x18] sm:$0x3] %vm264, 0.0
        %v266 = vld [vmem:[%s225] sm:$0xff]
        %v267 = vld [vmem:[%s225 + $0x8] sm:$0xff]
        %v268 = vld [vmem:[%s225 + $0x10] sm:$0xff]
        %272 = vrot.lane.b32.xlu0 %v266, 1
        %v273 = vpop.permute.xlu0 %272
        %274 = vrot.lane.b32.xlu0 %v267, 1
        %v275 = vpop.permute.xlu0 %274
        %276 = vrot.lane.b32.xlu0 %v268, 1
        %v277 = vpop.permute.xlu0 %276
        %vm281 = vcmask 203784
        %282 = vst.msk [vmem:[#allocation2 + $0x1] sm:$0xff] %vm281, %v273
        %283 = vst.msk [vmem:[#allocation2 + $0x9] sm:$0xff] %vm281, %v275
        %284 = vst.msk [vmem:[#allocation2 + $0x11] sm:$0xff] %vm281, %v277
        %s285 = sld [smem:[#allocation3]]
        %v286 = vstv %s285
        %v287 = vld [vmem:[#allocation2] sm:$0xff]
        %v288 = vld [vmem:[#allocation2 + $0x8] sm:$0xff]
        %v289 = vld [vmem:[#allocation2 + $0x10] sm:$0x3f]
        %s290 = sld [smem:[#allocation9]]
        %v291 = vstv %s290
        %v292 = vmul.f32 %v287, %v291
        %v293 = vmul.f32 %v288, %v291
        %v294 = vmul.f32 %v289, %v291
        %v295 = vadd.f32 %v286, %v292
        %v296 = vadd.f32 %v286, %v293
        %v297 = vadd.f32 %v286, %v294
        %s298 = sld [smem:[#allocation9 + $0x1]]
        %v299 = vstv %s298
        %v300 = vmul.f32 %v287, %v299
        %v301 = vmul.f32 %v288, %v299
        %v302 = vmul.f32 %v289, %v299
        %306 = vrot.lane.b32.xlu0 %v300, 127
        %v307 = vpop.permute.xlu0 %306
        %308 = vrot.lane.b32.xlu0 %v301, 127
        %v309 = vpop.permute.xlu0 %308
        %310 = vrot.lane.b32.xlu0 %v302, 127
        %v311 = vpop.permute.xlu0 %310
        %v315 = vadd.f32 %v295, %v307
        %v316 = vadd.f32 %v296, %v309
        %v317 = vadd.f32 %v297, %v311
        %s318 = sld [smem:[#allocation9 + $0x2]]
        %v319 = vstv %s318
        %v320 = vmul.f32 %v287, %v319
        %v321 = vmul.f32 %v288, %v319
        %v322 = vmul.f32 %v289, %v319
        %326 = vrot.lane.b32.xlu0 %v320, 126
        %v327 = vpop.permute.xlu0 %326
        %328 = vrot.lane.b32.xlu0 %v321, 126
        %v329 = vpop.permute.xlu0 %328
        %330 = vrot.lane.b32.xlu0 %v322, 126
        %v331 = vpop.permute.xlu0 %330
        %v335 = vadd.f32 %v315, %v327
        %v336 = vadd.f32 %v316, %v329
        %v337 = vadd.f32 %v317, %v331
        %s338 = sld [smem:[#allocation9 + $0x3]]
        %v339 = vstv %s338
        %v340 = vmul.f32 %v287, %v339
        %v341 = vmul.f32 %v288, %v339
        %v342 = vmul.f32 %v289, %v339
        %346 = vrot.lane.b32.xlu0 %v340, 125
        %v347 = vpop.permute.xlu0 %346
        %348 = vrot.lane.b32.xlu0 %v341, 125
        %v349 = vpop.permute.xlu0 %348
        %350 = vrot.lane.b32.xlu0 %v342, 125
        %v351 = vpop.permute.xlu0 %350
        %v355 = vadd.f32 %v335, %v347
        %v356 = vadd.f32 %v336, %v349
        %v357 = vadd.f32 %v337, %v351
        %s358 = sld [smem:[#allocation9 + $0x4]]
        %v359 = vstv %s358
        %v360 = vmul.f32 %v287, %v359
        %v361 = vmul.f32 %v288, %v359
        %v362 = vmul.f32 %v289, %v359
        %366 = vrot.lane.b32.xlu0 %v360, 124
        %v367 = vpop.permute.xlu0 %366
        %368 = vrot.lane.b32.xlu0 %v361, 124
        %v369 = vpop.permute.xlu0 %368
        %370 = vrot.lane.b32.xlu0 %v362, 124
        %v371 = vpop.permute.xlu0 %370
        %v375 = vadd.f32 %v355, %v367
        %v376 = vadd.f32 %v356, %v369
        %v377 = vadd.f32 %v357, %v371
        %v378 = vld [vmem:[#allocation2 + $0x1] sm:$0xff]
        %v379 = vld [vmem:[#allocation2 + $0x9] sm:$0xff]
        %v380 = vld [vmem:[#allocation2 + $0x11] sm:$0x3f]
        %s381 = sld [smem:[#allocation9 + $0x5]]
        %v382 = vstv %s381
        %v383 = vmul.f32 %v378, %v382
        %v384 = vmul.f32 %v379, %v382
        %v385 = vmul.f32 %v380, %v382
        %v386 = vadd.f32 %v375, %v383
        %v387 = vadd.f32 %v376, %v384
        %v388 = vadd.f32 %v377, %v385
        %s389 = sld [smem:[#allocation9 + $0x6]]
        %v390 = vstv %s389
        %v391 = vmul.f32 %v378, %v390
        %v392 = vmul.f32 %v379, %v390
        %v393 = vmul.f32 %v380, %v390
        %397 = vrot.lane.b32.xlu0 %v391, 127
        %v398 = vpop.permute.xlu0 %397
        %399 = vrot.lane.b32.xlu0 %v392, 127
        %v400 = vpop.permute.xlu0 %399
        %401 = vrot.lane.b32.xlu0 %v393, 127
        %v402 = vpop.permute.xlu0 %401
        %v406 = vadd.f32 %v386, %v398
        %v407 = vadd.f32 %v387, %v400
        %v408 = vadd.f32 %v388, %v402
        %s409 = sld [smem:[#allocation9 + $0x7]]
        %v410 = vstv %s409
        %v411 = vmul.f32 %v378, %v410
        %v412 = vmul.f32 %v379, %v410
        %v413 = vmul.f32 %v380, %v410
        %417 = vrot.lane.b32.xlu0 %v411, 126
        %v418 = vpop.permute.xlu0 %417
        %419 = vrot.lane.b32.xlu0 %v412, 126
        %v420 = vpop.permute.xlu0 %419
        %421 = vrot.lane.b32.xlu0 %v413, 126
        %v422 = vpop.permute.xlu0 %421
        %v426 = vadd.f32 %v406, %v418
        %v427 = vadd.f32 %v407, %v420
        %v428 = vadd.f32 %v408, %v422
        %s429 = sld [smem:[#allocation9 + $0x8]]
        %v430 = vstv %s429
        %v431 = vmul.f32 %v378, %v430
        %v432 = vmul.f32 %v379, %v430
        %v433 = vmul.f32 %v380, %v430
        %437 = vrot.lane.b32.xlu0 %v431, 125
        %v438 = vpop.permute.xlu0 %437
        %439 = vrot.lane.b32.xlu0 %v432, 125
        %v440 = vpop.permute.xlu0 %439
        %441 = vrot.lane.b32.xlu0 %v433, 125
        %v442 = vpop.permute.xlu0 %441
        %v446 = vadd.f32 %v426, %v438
        %v447 = vadd.f32 %v427, %v440
        %v448 = vadd.f32 %v428, %v442
        %s449 = sld [smem:[#allocation9 + $0x9]]
        %v450 = vstv %s449
        %v451 = vmul.f32 %v378, %v450
        %v452 = vmul.f32 %v379, %v450
        %v453 = vmul.f32 %v380, %v450
        %457 = vrot.lane.b32.xlu0 %v451, 124
        %v458 = vpop.permute.xlu0 %457
        %459 = vrot.lane.b32.xlu0 %v452, 124
        %v460 = vpop.permute.xlu0 %459
        %461 = vrot.lane.b32.xlu0 %v453, 124
        %v462 = vpop.permute.xlu0 %461
        %v466 = vadd.f32 %v446, %v458
        %v467 = vadd.f32 %v447, %v460
        %v468 = vadd.f32 %v448, %v462
        %v469 = vld [vmem:[#allocation2 + $0x2] sm:$0xff]
        %v470 = vld [vmem:[#allocation2 + $0xa] sm:$0xff]
        %v471 = vld [vmem:[#allocation2 + $0x12] sm:$0x3f]
        %s472 = sld [smem:[#allocation9 + $0xa]]
        %v473 = vstv %s472
        %v474 = vmul.f32 %v469, %v473
        %v475 = vmul.f32 %v470, %v473
        %v476 = vmul.f32 %v471, %v473
        %v477 = vadd.f32 %v466, %v474
        %v478 = vadd.f32 %v467, %v475
        %v479 = vadd.f32 %v468, %v476
        %s480 = sld [smem:[#allocation9 + $0xb]]
        %v481 = vstv %s480
        %v482 = vmul.f32 %v469, %v481
        %v483 = vmul.f32 %v470, %v481
        %v484 = vmul.f32 %v471, %v481
        %488 = vrot.lane.b32.xlu0 %v482, 127
        %v489 = vpop.permute.xlu0 %488
        %490 = vrot.lane.b32.xlu0 %v483, 127
        %v491 = vpop.permute.xlu0 %490
        %492 = vrot.lane.b32.xlu0 %v484, 127
        %v493 = vpop.permute.xlu0 %492
        %v497 = vadd.f32 %v477, %v489
        %v498 = vadd.f32 %v478, %v491
        %v499 = vadd.f32 %v479, %v493
        %s500 = sld [smem:[#allocation9 + $0xc]]
        %v501 = vstv %s500
        %v502 = vmul.f32 %v469, %v501
        %v503 = vmul.f32 %v470, %v501
        %v504 = vmul.f32 %v471, %v501
        %508 = vrot.lane.b32.xlu0 %v502, 126
        %v509 = vpop.permute.xlu0 %508
        %510 = vrot.lane.b32.xlu0 %v503, 126
        %v511 = vpop.permute.xlu0 %510
        %512 = vrot.lane.b32.xlu0 %v504, 126
        %v513 = vpop.permute.xlu0 %512
        %v517 = vadd.f32 %v497, %v509
        %v518 = vadd.f32 %v498, %v511
        %v519 = vadd.f32 %v499, %v513
        %s520 = sld [smem:[#allocation9 + $0xd]]
        %v521 = vstv %s520
        %v522 = vmul.f32 %v469, %v521
        %v523 = vmul.f32 %v470, %v521
        %v524 = vmul.f32 %v471, %v521
        %528 = vrot.lane.b32.xlu0 %v522, 125
        %v529 = vpop.permute.xlu0 %528
        %530 = vrot.lane.b32.xlu0 %v523, 125
        %v531 = vpop.permute.xlu0 %530
        %532 = vrot.lane.b32.xlu0 %v524, 125
        %v533 = vpop.permute.xlu0 %532
        %v537 = vadd.f32 %v517, %v529
        %v538 = vadd.f32 %v518, %v531
        %v539 = vadd.f32 %v519, %v533
        %s540 = sld [smem:[#allocation9 + $0xe]]
        %v541 = vstv %s540
        %v542 = vmul.f32 %v469, %v541
        %v543 = vmul.f32 %v470, %v541
        %v544 = vmul.f32 %v471, %v541
        %548 = vrot.lane.b32.xlu0 %v542, 124
        %v549 = vpop.permute.xlu0 %548
        %550 = vrot.lane.b32.xlu0 %v543, 124
        %v551 = vpop.permute.xlu0 %550
        %552 = vrot.lane.b32.xlu0 %v544, 124
        %v553 = vpop.permute.xlu0 %552
        %v557 = vadd.f32 %v537, %v549
        %v558 = vadd.f32 %v538, %v551
        %v559 = vadd.f32 %v539, %v553
        %v560 = vld [vmem:[#allocation2 + $0x3] sm:$0xff]
        %v561 = vld [vmem:[#allocation2 + $0xb] sm:$0xff]
        %v562 = vld [vmem:[#allocation2 + $0x13] sm:$0x3f]
        %s563 = sld [smem:[#allocation9 + $0xf]]
        %v564 = vstv %s563
        %v565 = vmul.f32 %v560, %v564
        %v566 = vmul.f32 %v561, %v564
        %v567 = vmul.f32 %v562, %v564
        %v568 = vadd.f32 %v557, %v565
        %v569 = vadd.f32 %v558, %v566
        %v570 = vadd.f32 %v559, %v567
        %s571 = sld [smem:[#allocation9 + $0x10]]
        %v572 = vstv %s571
        %v573 = vmul.f32 %v560, %v572
        %v574 = vmul.f32 %v561, %v572
        %v575 = vmul.f32 %v562, %v572
        %579 = vrot.lane.b32.xlu0 %v573, 127
        %v580 = vpop.permute.xlu0 %579
        %581 = vrot.lane.b32.xlu0 %v574, 127
        %v582 = vpop.permute.xlu0 %581
        %583 = vrot.lane.b32.xlu0 %v575, 127
        %v584 = vpop.permute.xlu0 %583
        %v588 = vadd.f32 %v568, %v580
        %v589 = vadd.f32 %v569, %v582
        %v590 = vadd.f32 %v570, %v584
        %s591 = sld [smem:[#allocation9 + $0x11]]
        %v592 = vstv %s591
        %v593 = vmul.f32 %v560, %v592
        %v594 = vmul.f32 %v561, %v592
        %v595 = vmul.f32 %v562, %v592
        %599 = vrot.lane.b32.xlu0 %v593, 126
        %v600 = vpop.permute.xlu0 %599
        %601 = vrot.lane.b32.xlu0 %v594, 126
        %v602 = vpop.permute.xlu0 %601
        %603 = vrot.lane.b32.xlu0 %v595, 126
        %v604 = vpop.permute.xlu0 %603
        %v608 = vadd.f32 %v588, %v600
        %v609 = vadd.f32 %v589, %v602
        %v610 = vadd.f32 %v590, %v604
        %s611 = sld [smem:[#allocation9 + $0x12]]
        %v612 = vstv %s611
        %v613 = vmul.f32 %v560, %v612
        %v614 = vmul.f32 %v561, %v612
        %v615 = vmul.f32 %v562, %v612
        %619 = vrot.lane.b32.xlu0 %v613, 125
        %v620 = vpop.permute.xlu0 %619
        %621 = vrot.lane.b32.xlu0 %v614, 125
        %v622 = vpop.permute.xlu0 %621
        %623 = vrot.lane.b32.xlu0 %v615, 125
        %v624 = vpop.permute.xlu0 %623
        %v628 = vadd.f32 %v608, %v620
        %v629 = vadd.f32 %v609, %v622
        %v630 = vadd.f32 %v610, %v624
        %s631 = sld [smem:[#allocation9 + $0x13]]
        %v632 = vstv %s631
        %v633 = vmul.f32 %v560, %v632
        %v634 = vmul.f32 %v561, %v632
        %v635 = vmul.f32 %v562, %v632
        %639 = vrot.lane.b32.xlu0 %v633, 124
        %v640 = vpop.permute.xlu0 %639
        %641 = vrot.lane.b32.xlu0 %v634, 124
        %v642 = vpop.permute.xlu0 %641
        %643 = vrot.lane.b32.xlu0 %v635, 124
        %v644 = vpop.permute.xlu0 %643
        %v648 = vadd.f32 %v628, %v640
        %v649 = vadd.f32 %v629, %v642
        %v650 = vadd.f32 %v630, %v644
        %v651 = vld [vmem:[#allocation2 + $0x4] sm:$0xff]
        %v652 = vld [vmem:[#allocation2 + $0xc] sm:$0xff]
        %v653 = vld [vmem:[#allocation2 + $0x14] sm:$0x3f]
        %s654 = sld [smem:[#allocation9 + $0x14]]
        %v655 = vstv %s654
        %v656 = vmul.f32 %v651, %v655
        %v657 = vmul.f32 %v652, %v655
        %v658 = vmul.f32 %v653, %v655
        %v659 = vadd.f32 %v648, %v656
        %v660 = vadd.f32 %v649, %v657
        %v661 = vadd.f32 %v650, %v658
        %s662 = sld [smem:[#allocation9 + $0x15]]
        %v663 = vstv %s662
        %v664 = vmul.f32 %v651, %v663
        %v665 = vmul.f32 %v652, %v663
        %v666 = vmul.f32 %v653, %v663
        %670 = vrot.lane.b32.xlu0 %v664, 127
        %v671 = vpop.permute.xlu0 %670
        %672 = vrot.lane.b32.xlu0 %v665, 127
        %v673 = vpop.permute.xlu0 %672
        %674 = vrot.lane.b32.xlu0 %v666, 127
        %v675 = vpop.permute.xlu0 %674
        %v679 = vadd.f32 %v659, %v671
        %v680 = vadd.f32 %v660, %v673
        %v681 = vadd.f32 %v661, %v675
        %s682 = sld [smem:[#allocation9 + $0x16]]
        %v683 = vstv %s682
        %v684 = vmul.f32 %v651, %v683
        %v685 = vmul.f32 %v652, %v683
        %v686 = vmul.f32 %v653, %v683
        %690 = vrot.lane.b32.xlu0 %v684, 126
        %v691 = vpop.permute.xlu0 %690
        %692 = vrot.lane.b32.xlu0 %v685, 126
        %v693 = vpop.permute.xlu0 %692
        %694 = vrot.lane.b32.xlu0 %v686, 126
        %v695 = vpop.permute.xlu0 %694
        %v699 = vadd.f32 %v679, %v691
        %v700 = vadd.f32 %v680, %v693
        %v701 = vadd.f32 %v681, %v695
        %s702 = sld [smem:[#allocation9 + $0x17]]
        %v703 = vstv %s702
        %v704 = vmul.f32 %v651, %v703
        %v705 = vmul.f32 %v652, %v703
        %v706 = vmul.f32 %v653, %v703
        %710 = vrot.lane.b32.xlu0 %v704, 125
        %v711 = vpop.permute.xlu0 %710
        %712 = vrot.lane.b32.xlu0 %v705, 125
        %v713 = vpop.permute.xlu0 %712
        %714 = vrot.lane.b32.xlu0 %v706, 125
        %v715 = vpop.permute.xlu0 %714
        %v719 = vadd.f32 %v699, %v711
        %v720 = vadd.f32 %v700, %v713
        %v721 = vadd.f32 %v701, %v715
        %s722 = sld [smem:[#allocation9 + $0x18]]
        %v723 = vstv %s722
        %v724 = vmul.f32 %v651, %v723
        %v725 = vmul.f32 %v652, %v723
        %v726 = vmul.f32 %v653, %v723
        %730 = vrot.lane.b32.xlu0 %v724, 124
        %v731 = vpop.permute.xlu0 %730
        %732 = vrot.lane.b32.xlu0 %v725, 124
        %v733 = vpop.permute.xlu0 %732
        %734 = vrot.lane.b32.xlu0 %v726, 124
        %v735 = vpop.permute.xlu0 %734
        %v739 = vadd.f32 %v719, %v731
        %v740 = vadd.f32 %v720, %v733
        %v741 = vadd.f32 %v721, %v735
        %vm745 = vcmask 1046528
        %v746 = vrot.slane %v739, 1
        %v747 = vrot.slane %v740, 1
        %v748 = vsel %vm745, %v746, %v747
        %v749 = vrot.slane %v741, 1
        %v750 = vsel %vm745, %v747, %v749
        %v754 = vmax.f32 %v739, %v748
        %v755 = vmax.f32 %v740, %v750
        %v756 = vmax.f32 %v741, %v749
        %vm760 = vcmask 1045504
        %v761 = vrot.slane %v754, 2
        %v762 = vrot.slane %v755, 2
        %v763 = vsel %vm760, %v761, %v762
        %v764 = vrot.slane %v756, 2
        %v765 = vsel %vm760, %v762, %v764
        %v769 = vmax.f32 %v754, %v763
        %v770 = vmax.f32 %v755, %v765
        %v771 = vmax.f32 %v756, %v764
        %vm775 = vcmask 1043456
        %v776 = vrot.slane %v769, 4
        %v777 = vrot.slane %v770, 4
        %v778 = vsel %vm775, %v776, %v777
        %v779 = vrot.slane %v771, 4
        %v780 = vsel %vm775, %v777, %v779
        %v783 = vmax.f32 %v769, %v778
        %v784 = vmax.f32 %v770, %v780
        %v785 = vmax.f32 %v783, %v784
        %v787 = vrot.slane %v785, 2
        %v789 = vmax.f32 %v785, %v787
        %v791 = vrot.slane %v789, 1
        %v793 = vrot.slane %v789, 2
        %vm795 = vcmask 1040384
        %v796 = vsel %vm795, %v789, %v791
        %vm797 = vcmask 1041408
        %v798 = vsel %vm797, %v796, %v793
        %800 = vrot.lane.b32.xlu0 %v798, 127
        %v801 = vpop.permute.xlu0 %800
        %v803 = vmax.f32 %v798, %v801
        %805 = vrot.lane.b32.xlu0 %v803, 126
        %v806 = vpop.permute.xlu0 %805
        %v808 = vmax.f32 %v803, %v806
        %810 = vrot.lane.b32.xlu0 %v808, 124
        %v811 = vpop.permute.xlu0 %810
        %v813 = vmax.f32 %v808, %v811
        %815 = vrot.lane.b32.xlu0 %v813, 120
        %v816 = vpop.permute.xlu0 %815
        %v818 = vmax.f32 %v813, %v816
        %820 = vrot.lane.b32.xlu0 %v818, 126
        %v821 = vpop.permute.xlu0 %820
        %v823 = vmax.f32 %v818, %v821
        %825 = vrot.lane.b32.xlu0 %v823, 127
        %v826 = vpop.permute.xlu0 %825
        %828 = vrot.lane.b32.xlu0 %v823, 126
        %v829 = vpop.permute.xlu0 %828
        %vm831 = vcmask 7168
        %v832 = vsel %vm831, %v823, %v826
        %vm833 = vcmask 15360
        %v834 = vsel %vm833, %v832, %v829
        %s835 = sld [smem:[#allocation4]]
        %v836 = vstv %s835
        %v837 = vmul.f32 %v834, %v836
        %s838 = sld [smem:[#allocation5]]
        %v839 = vstv %s838
        %v840 = vadd.f32 %v837, %v839
        %vm841 = vcmask 18432
        %842 = vst.msk [vmem:[%s259] sm:$0x7] %vm841, %v840
        %p843 = scmp.lt.s32.totalorder %s23, 1
        %s844 = scalar_select %p843, %s23, 1
        %s845 = smul.addr %s844, 4
        %s846 = scalar_lea.vmem %s5, %s845
        // Predicated region
        $region49: #{tpu_custom_call.1} parent=39 // pred_check
          %p847 = pneg %p151
        $region50: #{tpu_custom_call.1} parent=39 // pred_check_branch
          %849 = sbr.rel (%p847) target = $region52
        $region51: #{tpu_custom_call.1} parent=39 // pred_region
          _
        $region52: #{tpu_custom_call.1} parent=39 // pred_fallthru
          _
      $region40: #{tpu_custom_call.1} parent=5 // pred_fallthru
        _
      %p850 = scmp.le.s32.totalorder 2, %s18
      // Predicated region
      $region53: #{tpu_custom_call.1} parent=5 // pred_check
        %p851 = pneg %p850
      $region54: #{tpu_custom_call.1} parent=5 // pred_check_branch
        %853 = sbr.rel (%p851) target = $region56
      $region55: #{tpu_custom_call.1} parent=5 // pred_region
        %s854 = ssub.s32 %s18, 2
        // Predicated region
        $region57: #{tpu_custom_call.1} parent=55 // pred_check
          %p855 = pneg %p157
        $region58: #{tpu_custom_call.1} parent=55 // pred_check_branch
          %857 = sbr.rel (%p855) target = $region60
        $region59: #{tpu_custom_call.1} parent=55 // pred_region
          %p858 = scmp.lt.s32.totalorder %s24, 1
          %s859 = scalar_select %p858, %s24, 1
          %s860 = smul.addr %s859, 4
          %s861 = scalar_lea.vmem %s5, %s860
        $region60: #{tpu_custom_call.1} parent=55 // pred_fallthru
          _
      $region56: #{tpu_custom_call.1} parent=5 // pred_fallthru
        _
    $region6: #{tpu_custom_call.1} parent=1 // loop_footer
      %s22 = sadd.s32 1, %s18
    $region7: #{tpu_custom_call.1} parent=1 // loop_footer_branch
      %17 = sbr.rel target = $region3
    $region8: #{tpu_custom_call.1} parent=1 // loop_exit
      _
    %862 = vsyncpa [#allocation7], 1
    %s863 = scalar_lea.sflag [#allocation7], 1
    %864 = vsyncpa %s863, 1
    %865 = vsyncpa [#allocation8], 1
    %s866 = scalar_lea.sflag [#allocation8], 1
    %867 = vsyncpa %s866, 1

</llo_original>
